<compile_context>
chip_gen: v5e
topology: v5e:2x2
jax: 0.10.0
libtpu: 0.0.40
codegen_flags: <defaults>
</compile_context>

<pallas_src>
import math

import jax
import jax.numpy as jnp
from jax.experimental import pallas as pl
from jax.experimental.pallas import tpu as pltpu


def _round_up(x, m):
    return ((x + m - 1) // m) * m


def classifier_kernel(x_ref, w_ref, b_ref, o_ref):
    # In-kernel bf16 cast of the activation tile; MXU matmul with f32 accumulation;
    # bias add + numerically-stable log_softmax in f32.
    x_bf = x_ref[...].astype(jnp.bfloat16)
    logits = jnp.dot(x_bf, w_ref[...],
                     preferred_element_type=jnp.float32) + b_ref[...]
    row_max = jnp.max(logits, axis=-1, keepdims=True)
    shifted = logits - row_max
    lse = jnp.log(jnp.sum(jnp.exp(shifted), axis=-1, keepdims=True))
    o_ref[...] = (shifted - lse).astype(o_ref.dtype)


def prep_classifier_params(weight, bias):
    """One-time parameter prep (hoisted out of the per-call wrapper).

    weight: (n_out, n_hid) f32 (PyTorch nn.Linear layout); bias: (n_out,) f32.
    Returns (weight_t_bf16 of shape (n_hid, n_out), bias_f32 of shape (1, n_out)).
    """
    weight_t = jnp.asarray(weight).T.astype(jnp.bfloat16)
    bias2d = jnp.asarray(bias).reshape(1, -1).astype(jnp.float32)
    return weight_t, bias2d


def classifier_forward(x, weight_t_bf16, bias_f32, *, tm_max=512, min_row_steps=4):
    """log_softmax(x @ W^T + b, axis=-1) then squeeze, matching Classifier.forward.

    x: (N, n_hid) or (n_hid,); weight_t_bf16: (n_hid, n_out) bf16 (prepped);
    bias_f32: (1, n_out) f32.

    tm_max=512 is safe under v7x's 64 MiB VMEM; on v5e/v6e (128 MiB) pass
    tm_max=1024 for very large N to amortize per-grid-step overhead.
    """
    if x.ndim == 1:
        x = x[None, :]
    N, n_hid = x.shape
    n_out = weight_t_bf16.shape[1]

    # Row tile: multiple of 16 (bf16 row packing); aim for >= min_row_steps grid
    # steps so both v7x TensorCores get work and DMAs overlap compute. Tiny inputs
    # use a single full-extent block.
    if N <= 16:
        TM = N
    else:
        TM = min(tm_max, _round_up(pl.cdiv(N, min_row_steps), 16))
    grid = (pl.cdiv(N, TM),)   # partial last block: OOB reads unused, writes masked

    # Raise the scoped-VMEM limit only if the per-step footprint needs it
    # (double-buffered x/out tiles + resident W/b + elementwise temporaries).
    vmem_needed = (2 * TM * n_hid * x.dtype.itemsize      # x tile, double-buffered
                   + 2 * TM * n_out * 4                   # out tile, double-buffered
                   + 2 * (n_hid * n_out * 2 + n_out * 4)  # W (bf16) + b (f32)
                   + 4 * TM * n_out * 4)                  # logits/shifted/exp temps
    params = dict(dimension_semantics=("parallel",))      # megacore row sharding
    if vmem_needed > 12 * 1024 * 1024:
        params["vmem_limit_bytes"] = min(2 * vmem_needed, 64 * 1024 * 1024)

    cost = pl.CostEstimate(
        flops=2 * N * n_hid * n_out,
        transcendentals=N * n_out,                        # exp in the softmax
        bytes_accessed=(N * n_hid * x.dtype.itemsize      # x read (native dtype)
                        + n_hid * n_out * 2               # W (bf16)
                        + n_out * 4                       # bias
                        + N * n_out * 4),                 # out write (f32)
    )

    out = pl.pallas_call(
        classifier_kernel,
        out_shape=jax.ShapeDtypeStruct((N, n_out), jnp.float32),
        grid_spec=pltpu.PrefetchScalarGridSpec(
            num_scalar_prefetch=0,
            grid=grid,
            in_specs=[
                pl.BlockSpec((TM, n_hid), lambda i: (i, 0)),      # tiled x rows
                pl.BlockSpec((n_hid, n_out), lambda i: (0, 0)),   # VMEM-resident W
                pl.BlockSpec((1, n_out), lambda i: (0, 0)),       # VMEM-resident b
            ],
            out_specs=pl.BlockSpec((TM, n_out), lambda i: (i, 0)),
        ),
        compiler_params=pltpu.CompilerParams(**params),
        cost_estimate=cost,
    )(x, weight_t_bf16, bias_f32)

    # torch: log_softmax(tx.squeeze(), dim=-1). squeeze() only changes semantics
    # when n_out == 1 and N > 1 (torch would then softmax over the batch dim),
    # a degenerate classifier we don't replicate.
    # TODO(synk): guard/replicate torch's n_out == 1 squeeze-then-softmax edge case.
    return jnp.squeeze(out)


def init_classifier_params(key, n_hid, n_out):
    """Deterministic init matching nn.Linear's default U(-1/sqrt(n_hid), +)."""
    k_w, k_b = jax.random.split(key)
    bound = 1.0 / math.sqrt(n_hid)
    weight = jax.random.uniform(k_w, (n_out, n_hid), jnp.float32,
                                minval=-bound, maxval=bound)   # torch layout
    bias = jax.random.uniform(k_b, (n_out,), jnp.float32,
                              minval=-bound, maxval=bound)
    return weight, bias


def _reference(x, weight_t_bf16, bias_f32):
    """Plain-JAX reference with the same bf16-input / f32-accumulate matmul."""
    if x.ndim == 1:
        x = x[None, :]
    logits = jnp.dot(x.astype(jnp.bfloat16), weight_t_bf16,
                     preferred_element_type=jnp.float32) + bias_f32
    return jnp.squeeze(jax.nn.log_softmax(logits, axis=-1))


if __name__ == "__main__":
    key = jax.random.PRNGKey(0)
    k_p, k_x1, k_x2, k_x3 = jax.random.split(key, 4)

    n_hid, n_out = 32, 16
    weight, bias = init_classifier_params(k_p, n_hid, n_out)
    weight_t, bias2d = prep_classifier_params(weight, bias)   # one-time prep

    # Small case: single full-extent tile (grid = 1).
    N = 8
    x = jax.random.normal(k_x1, (N, n_hid), jnp.float32)
    y = classifier_forward(x, weight_t, bias2d)
    jax.block_until_ready(y)
    assert y.shape == (N, n_out)
    assert jnp.allclose(y, _reference(x, weight_t, bias2d), atol=1e-4, rtol=1e-4)
    # Loose check against pure-f32 math (bf16 matmul rounding).
    ref_f32 = jax.nn.log_softmax(x @ weight.T + bias, axis=-1)
    assert jnp.allclose(y, ref_f32, atol=5e-2, rtol=5e-2)

    # Multi-tile case with a partial (masked) last block: N=600 -> TM=160, grid=(4,).
    N2 = 600
    x2 = jax.random.normal(k_x2, (N2, n_hid), jnp.float32)
    y2 = classifier_forward(x2, weight_t, bias2d)
    jax.block_until_ready(y2)
    assert y2.shape == (N2, n_out)
    assert jnp.allclose(y2, _reference(x2, weight_t, bias2d), atol=1e-4, rtol=1e-4)
    assert bool(jnp.all(jnp.isfinite(y2)))

    # Single-row case exercising torch's tx.squeeze() behavior (output shape (n_out,)).
    x3 = jax.random.normal(k_x3, (1, n_hid), jnp.float32)
    y3 = classifier_forward(x3, weight_t, bias2d)
    jax.block_until_ready(y3)
    assert y3.shape == (n_out,)
    assert jnp.allclose(y3, _reference(x3, weight_t, bias2d), atol=1e-4, rtol=1e-4)

    print("KERNEL_OK")
</pallas_src>

<mosaic_0001>
module attributes {stable_mosaic.version = 11 : i64} {
  func.func @classifier_kernel(%arg0: i32, %arg1: memref<8x32xf32, #tpu.memory_space<vmem>>, %arg2: memref<32x16xbf16, #tpu.memory_space<vmem>>, %arg3: memref<1x16xf32, #tpu.memory_space<vmem>>, %arg4: memref<8x16xf32, #tpu.memory_space<vmem>>) attributes {dimension_semantics = [#tpu.dimension_semantics<parallel>], iteration_bounds = array<i64: 1>, scalar_prefetch = 0 : i64, scratch_operands = 0 : i64, tpu.core_type = #tpu.core_type<tc>, window_params = [{transform_indices = @transform_0, window_bounds = array<i64: 8, 32>}, {pipeline_mode = #tpu.pipeline_mode<synchronous>, transform_indices = @transform_1, window_bounds = array<i64: 32, 16>}, {pipeline_mode = #tpu.pipeline_mode<synchronous>, transform_indices = @transform_2, window_bounds = array<i64: 1, 16>}, {transform_indices = @transform_3, window_bounds = array<i64: 8, 16>}]} {
    %c0 = arith.constant 0 : index
    %c0_0 = arith.constant 0 : index
    %0 = vector.load %arg1[%c0, %c0_0] : memref<8x32xf32, #tpu.memory_space<vmem>>, vector<8x32xf32>
    %1 = arith.truncf %0 : vector<8x32xf32> to vector<8x32xbf16>
    %c0_1 = arith.constant 0 : index
    %c0_2 = arith.constant 0 : index
    %2 = vector.load %arg2[%c0_1, %c0_2] : memref<32x16xbf16, #tpu.memory_space<vmem>>, vector<32x16xbf16>
    %cst = arith.constant dense<0.000000e+00> : vector<8x16xf32>
    %3 = tpu.matmul %1, %2, %cst {dimension_numbers = #tpu.dot_dimension_numbers<[1], [0], [0], [1], [0, 0, 1, 1], [], []>} : vector<8x32xbf16>, vector<32x16xbf16>, vector<8x16xf32> -> vector<8x16xf32>
    %c0_3 = arith.constant 0 : index
    %c0_4 = arith.constant 0 : index
    %4 = vector.load %arg3[%c0_3, %c0_4] : memref<1x16xf32, #tpu.memory_space<vmem>>, vector<1x16xf32>
    %5 = vector.broadcast %4 : vector<1x16xf32> to vector<8x16xf32>
    %6 = arith.addf %3, %5 : vector<8x16xf32>
    %cst_5 = arith.constant dense<0xFF800000> : vector<8xf32>
    %7 = vector.multi_reduction <maximumf>, %6, %cst_5 [1] : vector<8x16xf32> to vector<8xf32>
    %8 = vector.shape_cast %7 : vector<8xf32> to vector<8x1xf32>
    %9 = vector.broadcast %8 : vector<8x1xf32> to vector<8x16xf32>
    %10 = arith.subf %6, %9 : vector<8x16xf32>
    %11 = math.exp %10 : vector<8x16xf32>
    %cst_6 = arith.constant dense<0.000000e+00> : vector<8xf32>
    %12 = vector.multi_reduction <add>, %11, %cst_6 [1] : vector<8x16xf32> to vector<8xf32>
    %13 = vector.shape_cast %12 : vector<8xf32> to vector<8x1xf32>
    %14 = math.log %13 : vector<8x1xf32>
    %15 = vector.broadcast %14 : vector<8x1xf32> to vector<8x16xf32>
    %16 = arith.subf %10, %15 : vector<8x16xf32>
    %c0_7 = arith.constant 0 : index
    %c0_8 = arith.constant 0 : index
    %17 = vector.load %arg4[%c0_7, %c0_8] : memref<8x16xf32, #tpu.memory_space<vmem>>, vector<8x16xf32>
    tpu.vector_store %arg4[%c0_7, %c0_8], %16 {strides = array<i32>} : memref<8x16xf32, #tpu.memory_space<vmem>>, vector<8x16xf32>,
    return
  }
  func.func @transform_0(%arg0: i32) -> (i32, i32) {
    %c0_i32 = arith.constant 0 : i32
    %c0_i32_0 = arith.constant 0 : i32
    return %arg0, %c0_i32 : i32, i32
  }
  func.func @transform_1(%arg0: i32) -> (i32, i32) {
    %c0_i32 = arith.constant 0 : i32
    %c0_i32_0 = arith.constant 0 : i32
    %c0_i32_1 = arith.constant 0 : i32
    return %c0_i32, %c0_i32_0 : i32, i32
  }
  func.func @transform_2(%arg0: i32) -> (i32, i32) {
    %c0_i32 = arith.constant 0 : i32
    %c0_i32_0 = arith.constant 0 : i32
    %c0_i32_1 = arith.constant 0 : i32
    return %c0_i32, %c0_i32_0 : i32, i32
  }
  func.func @transform_3(%arg0: i32) -> (i32, i32) {
    %c0_i32 = arith.constant 0 : i32
    %c0_i32_0 = arith.constant 0 : i32
    return %arg0, %c0_i32 : i32, i32
  }
}

</mosaic_0001>

<llo_original>
// kernel: tpu_custom_call.1
$region0: #{tpu_custom_call.1}
  #allocation0 [shape = 'u32[]', space=smem, size = 0x4, offset = 0x4, fixed_abs, tag = 'smem constant byte address 0x4 - core index']
  #allocation1 [shape = 'u32[72,128]{1,0:T(1,128)}', space=vmem, size = 0x9000, scoped, tag = 'internal scratch']
  %s0 = inlined_call_operand.vmem [shape: f32[8,32], index: 0, kind: input, shape index: {}]
  %s1 = inlined_call_operand.vmem [shape: bf16[32,16], index: 1, kind: input, shape index: {}]
  %s2 = inlined_call_operand.vmem [shape: f32[1,16], index: 2, kind: input, shape index: {}]
  %s3 = inlined_call_operand.hbm [shape: f32[8,16], index: 3, kind: output, shape index: {}]
  %s4 = sld [smem:[#allocation0]]
  $region22: #{tpu_custom_call.1} parent=0
    _
  %s6 = ssub.s32 1, %s4
  %s7 = scalar_select 0, %s6, %s4
  $region1: #{tpu_custom_call.1} parent=0
    #allocation2 [shape = 'u8[4096]{0}', space=vmem, size = 0x1000, scoped, tag = 'output window, operand 0, single buffered']
    #allocation3 [shape = 's32[1]{0}', space=sflag, size = 0x4, scoped, tag = 'scoped memory for tpu_custom_call.1']
    %8 = vsyncpa [#allocation3], 0
    // Predicated region
    $region2: #{tpu_custom_call.1} parent=1 // pred_check
      _
    $region3: #{tpu_custom_call.1} parent=1 // pred_check_branch
      %10 = sbr.rel (0) target = $region5
    $region4: #{tpu_custom_call.1} parent=1 // pred_region
      _
    $region5: #{tpu_custom_call.1} parent=1 // pred_fallthru
      _
    // Predicated region
    $region6: #{tpu_custom_call.1} parent=1 // pred_check
      _
    $region7: #{tpu_custom_call.1} parent=1 // pred_check_branch
      %12 = sbr.rel (0) target = $region9
    $region8: #{tpu_custom_call.1} parent=1 // pred_region
      _
    $region9: #{tpu_custom_call.1} parent=1 // pred_fallthru
      _
    // Predicated region
    $region10: #{tpu_custom_call.1} parent=1 // pred_check
      _
    $region11: #{tpu_custom_call.1} parent=1 // pred_check_branch
      %14 = sbr.rel (0) target = $region13
    $region12: #{tpu_custom_call.1} parent=1 // pred_region
      _
    $region13: #{tpu_custom_call.1} parent=1 // pred_fallthru
      _
    %v16 = vld [vmem:[%s0] sm:$0xff]
    %v17 = vpack.c.bf16 %v16, %v16
    %v18 = vld [vmem:[%s1] sm:$0xf]
    %v19 = vld [vmem:[%s1 + $0x4] sm:$0xf]
    %v20 = vld [vmem:[%s1 + $0x8] sm:$0xf]
    %v21 = vld [vmem:[%s1 + $0xc] sm:$0xf]
    %v22 = vld [vmem:[%s2] sm:$0x1]
    %v24 = vperm.slane %v22, 0
    %v30 = vunpack.c.l.b16 %v18
    %v31 = vunpack.c.l.b16 %v19
    %v32 = vunpack.c.l.b16 %v20
    %v33 = vunpack.c.l.b16 %v21
    %v34 = vpack.c.b16 %v31, %v30
    %v35 = vpack.c.b16 %v33, %v32
    %vm38 = vcmask 261120
    %v40 = vsel %vm38, %v17, 0
    %42 = vmatpush.bf16.msra.mxu0 0
    %43 = vmatpush.bf16.msra.mxu0 0
    %44 = vmatpush.bf16.msra.mxu0 0
    %45 = vmatpush.bf16.msra.mxu0 0
    %46 = vmatpush.bf16.msra.mxu0 0
    %47 = vmatpush.bf16.msra.mxu0 0
    %48 = vmatpush.bf16.msra.mxu0 %v35
    %49 = vmatpush.bf16.msra.mxu0 %v34
    %50 = vmatmul.bf16.gmra.mxu0 %v40
    %v51 = vpop.f32.mrf.mxu0
    %v52 = vadd.f32 %v24, %v51
    %v53 = vpop.f32.mrf.mxu0
    %54 = vdwg.mxu0
    %vm55 = vcmask 130048
    %v56 = vsel %vm55, %v52, -inf
    %57 = vmax.xlane.f32.xlu0 %v56
    %v58 = vpop.xlane.xlu0 %57
    %v59 = vsub.f32 %v52, %v58
    %v60 = vmul.f32 %v59, 1.442695
    %v61 = vpow.pop %v60
    %v62 = vsel %vm55, %v61, 0.0
    %63 = vadd.xlane.f32.xlu0 %v62
    %v64 = vpop.xlane.xlu0 %63
    %v65 = vlog2.pop %v64
    %v66 = vmul.f32 %v65, 0.6931472
    %v67 = vsub.f32 %v59, %v66
    %68 = vst.msk [vmem:[#allocation2] sm:$0xff] %vm55, %v67
    // Predicated region
    $region14: #{tpu_custom_call.1} parent=1 // pred_check
      _
    $region15: #{tpu_custom_call.1} parent=1 // pred_check_branch
      %70 = sbr.rel (0) target = $region17
    $region16: #{tpu_custom_call.1} parent=1 // pred_region
      %72 = vsyncadd [#allocation3], 0
      %s74 = sshll.u32 [#allocation2], 4
      %s75 = int_to_ptr.vmem [resolvable:$true] %s74
      %s76 = sshll.u32 %s3, 4
      %s77 = int_to_ptr.hbm [resolvable:$true] %s76
      %79 = dma.vmem_to_hbm [thread:$0]  %s75, 128, %s77, [#allocation3]
    $region17: #{tpu_custom_call.1} parent=1 // pred_fallthru
      _
    // Predicated region
    $region18: #{tpu_custom_call.1} parent=1 // pred_check
      _
    $region19: #{tpu_custom_call.1} parent=1 // pred_check_branch
      %81 = sbr.rel (0) target = $region21
    $region20: #{tpu_custom_call.1} parent=1 // pred_region
      %83 = dma.done [#allocation3], 128
    $region21: #{tpu_custom_call.1} parent=1 // pred_fallthru
      _
    %84 = vsyncpa [#allocation3], 1

</llo_original>
